<compile_context>
chip_gen: v5e
topology: v5e:2x2
jax: 0.10.0
libtpu: 0.0.40
codegen_flags: <defaults>
</compile_context>

<pallas_src>
import functools

import jax
import jax.numpy as jnp
from jax import lax
from jax.experimental import pallas as pl
from jax.experimental.pallas import tpu as pltpu


def _lstm_corona_kernel(x_ref, w_ih_t_ref, w_hh_t_ref, b_ref, fc_w_ref,
                        fc_b_ref, out_ref, *, h_size, seq_len, in_size,
                        out_size):
    """Full forward pass: input projection, LSTM recurrence, final Linear.

    x_ref      : (seq, in_size)   VMEM
    w_ih_t_ref : (in_size, 4*H)   VMEM
    w_hh_t_ref : (H, 4*H)         VMEM
    b_ref      : (1, 4*H)         VMEM   (= b_ih + b_hh)
    fc_w_ref   : (out_size, H)    VMEM   (PyTorch-native layout)
    fc_b_ref   : (1, out_size)    VMEM
    out_ref    : (1, out_size)    VMEM   (prediction at the last timestep)
    """
    H = h_size

    # ---- Input projection for all timesteps at once -------------------------
    # in_size == 1 => K=1 outer product: keep it on the VPU as a broadcast
    # multiply-add; avoids an MXU push/pop and the implicit K-padding to 128.
    if in_size == 1:
        xg = x_ref[...] * w_ih_t_ref[...] + b_ref[...]          # (seq, 4H)
    else:
        xg = (jnp.dot(x_ref[...], w_ih_t_ref[...],
                      preferred_element_type=jnp.float32) + b_ref[...])

    w_hh_t = w_hh_t_ref[...]                                     # (H, 4H)

    h = jnp.zeros((1, H), jnp.float32)
    c = jnp.zeros((1, H), jnp.float32)

    # ---- Recurrence: fully unrolled (seq_len is static and small) -----------
    for t in range(seq_len):
        gates = xg[t:t + 1, :] + jnp.dot(
            h, w_hh_t, preferred_element_type=jnp.float32)       # (1, 4H)
        # One sigmoid + one tanh over the whole gates vreg, then slice,
        # instead of 3 sigmoids + 1 tanh on sub-slices.
        sg = jax.nn.sigmoid(gates)
        th = jnp.tanh(gates)
        i = sg[:, 0 * H:1 * H]
        f = sg[:, 1 * H:2 * H]
        g = th[:, 2 * H:3 * H]
        o = sg[:, 3 * H:4 * H]
        c = f * c + i * g
        h = o * jnp.tanh(c)

    # ---- Final Linear on the last hidden state (== pred[-1]) ----------------
    if out_size == 1:
        # (1,30) x (30,1) is a single dot product: VPU multiply + lane reduce
        # beats an MXU matmul with M=1, N=1 at the tail of the critical path.
        out_ref[...] = (jnp.sum(h * fc_w_ref[...], axis=-1, keepdims=True)
                        + fc_b_ref[...])
    else:
        out_ref[...] = (jnp.dot(h, jnp.transpose(fc_w_ref[...]),
                                preferred_element_type=jnp.float32)
                        + fc_b_ref[...])


def prepare_params(params):
    """One-time weight preprocessing (hoist transposes/folds out of the
    per-call path; the kernel itself is sub-microsecond)."""
    h_size = params["w_hh"].shape[1]
    out_size = params["fc_w"].shape[0]
    return {
        "w_ih_t": jnp.transpose(params["w_ih"]).astype(jnp.float32),   # (in, 4H)
        "w_hh_t": jnp.transpose(params["w_hh"]).astype(jnp.float32),   # (H, 4H)
        "b": (params["b_ih"] + params["b_hh"])
             .reshape(1, 4 * h_size).astype(jnp.float32),              # (1, 4H)
        "fc_w": params["fc_w"].reshape(out_size, h_size)
                .astype(jnp.float32),                                  # (out, H)
        "fc_b": params["fc_b"].reshape(1, out_size).astype(jnp.float32),
    }


def lstm_corona_forward(sequence_data, prepped):
    """Pallas equivalent of LSTM_Corona.forward.

    sequence_data: (seq,) or (seq, in_size) f32
    prepped:       output of prepare_params(params)
    returns:       (out_size,) f32   -- pred[-1]
    """
    w_ih_t = prepped["w_ih_t"]
    w_hh_t = prepped["w_hh_t"]
    b = prepped["b"]
    fc_w = prepped["fc_w"]
    fc_b = prepped["fc_b"]

    in_size = w_ih_t.shape[0]
    h_size = w_hh_t.shape[0]
    out_size = fc_w.shape[0]

    x = jnp.asarray(sequence_data, jnp.float32).reshape(-1, in_size)
    seq = x.shape[0]

    vmem = pl.BlockSpec(memory_space=pltpu.MemorySpace.VMEM)
    kernel = functools.partial(_lstm_corona_kernel, h_size=h_size,
                               seq_len=seq, in_size=in_size,
                               out_size=out_size)

    pred_last = pl.pallas_call(
        kernel,
        out_shape=jax.ShapeDtypeStruct((1, out_size), jnp.float32),
        in_specs=[vmem, vmem, vmem, vmem, vmem, vmem],
        out_specs=vmem,
    )(x, w_ih_t, w_hh_t, b, fc_w, fc_b)

    return pred_last.reshape(out_size)


def _reference_forward(sequence_data, params):
    """Pure-JAX reference of the same math (sanity check)."""
    w_ih, w_hh, b_ih, b_hh, fc_w, fc_b = (
        params["w_ih"], params["w_hh"], params["b_ih"], params["b_hh"],
        params["fc_w"], params["fc_b"])
    H = w_hh.shape[1]
    x = jnp.asarray(sequence_data, jnp.float32).reshape(-1, w_ih.shape[1])

    def step(carry, x_t):
        h, c = carry
        g = x_t @ w_ih.T + b_ih + h @ w_hh.T + b_hh
        i = jax.nn.sigmoid(g[0 * H:1 * H])
        f = jax.nn.sigmoid(g[1 * H:2 * H])
        gg = jnp.tanh(g[2 * H:3 * H])
        o = jax.nn.sigmoid(g[3 * H:4 * H])
        c = f * c + i * gg
        h = o * jnp.tanh(c)
        return (h, c), h

    (h_last, _), _ = lax.scan(step, (jnp.zeros(H), jnp.zeros(H)), x)
    return h_last @ fc_w.T + fc_b


if __name__ == "__main__":
    in_size, h_size, out_size = 1, 30, 1
    seq_len = 8

    key = jax.random.PRNGKey(0)
    k = jax.random.split(key, 7)
    bound = 1.0 / jnp.sqrt(jnp.float32(h_size))

    params = {
        # PyTorch-style uniform(-1/sqrt(H), 1/sqrt(H)) init, deterministic.
        "w_ih": jax.random.uniform(k[0], (4 * h_size, in_size), jnp.float32,
                                   -bound, bound),
        "w_hh": jax.random.uniform(k[1], (4 * h_size, h_size), jnp.float32,
                                   -bound, bound),
        "b_ih": jax.random.uniform(k[2], (4 * h_size,), jnp.float32,
                                   -bound, bound),
        "b_hh": jax.random.uniform(k[3], (4 * h_size,), jnp.float32,
                                   -bound, bound),
        "fc_w": jax.random.uniform(k[4], (out_size, h_size), jnp.float32,
                                   -bound, bound),
        "fc_b": jax.random.uniform(k[5], (out_size,), jnp.float32,
                                   -bound, bound),
    }

    # sequence_data analogous to the PyTorch module's input: a 1-D sequence.
    sequence_data = jax.random.normal(k[6], (seq_len,), jnp.float32)

    prepped = prepare_params(params)        # done once, outside the hot path
    pred = lstm_corona_forward(sequence_data, prepped)
    pred = jax.block_until_ready(pred)

    ref = jax.block_until_ready(_reference_forward(sequence_data, params))
    assert pred.shape == (out_size,)
    assert jnp.allclose(pred, ref, rtol=1e-3, atol=1e-3), (pred, ref)

    print("KERNEL_OK")
</pallas_src>

<mosaic_0001>
module attributes {stable_mosaic.version = 11 : i64} {
  func.func @_lstm_corona_kernel(%arg0: memref<8x1xf32, #tpu.memory_space<vmem>>, %arg1: memref<1x120xf32, #tpu.memory_space<vmem>>, %arg2: memref<30x120xf32, #tpu.memory_space<vmem>>, %arg3: memref<1x120xf32, #tpu.memory_space<vmem>>, %arg4: memref<1x30xf32, #tpu.memory_space<vmem>>, %arg5: memref<1x1xf32, #tpu.memory_space<vmem>>, %arg6: memref<1x1xf32, #tpu.memory_space<vmem>>) attributes {dimension_semantics = [], scalar_prefetch = 0 : i64, scratch_operands = 0 : i64, tpu.core_type = #tpu.core_type<tc>} {
    %c0 = arith.constant 0 : index
    %c0_0 = arith.constant 0 : index
    %0 = vector.load %arg0[%c0, %c0_0] : memref<8x1xf32, #tpu.memory_space<vmem>>, vector<8x1xf32>
    %c0_1 = arith.constant 0 : index
    %c0_2 = arith.constant 0 : index
    %1 = vector.load %arg1[%c0_1, %c0_2] : memref<1x120xf32, #tpu.memory_space<vmem>>, vector<1x120xf32>
    %2 = vector.broadcast %0 : vector<8x1xf32> to vector<8x120xf32>
    %3 = vector.broadcast %1 : vector<1x120xf32> to vector<8x120xf32>
    %4 = arith.mulf %2, %3 : vector<8x120xf32>
    %c0_3 = arith.constant 0 : index
    %c0_4 = arith.constant 0 : index
    %5 = vector.load %arg3[%c0_3, %c0_4] : memref<1x120xf32, #tpu.memory_space<vmem>>, vector<1x120xf32>
    %6 = vector.broadcast %5 : vector<1x120xf32> to vector<8x120xf32>
    %7 = arith.addf %4, %6 : vector<8x120xf32>
    %c0_5 = arith.constant 0 : index
    %c0_6 = arith.constant 0 : index
    %8 = vector.load %arg2[%c0_5, %c0_6] : memref<30x120xf32, #tpu.memory_space<vmem>>, vector<30x120xf32>
    %cst = arith.constant 0.000000e+00 : f32
    %9 = vector.broadcast %cst : f32 to vector<1x30xf32>
    %cst_7 = arith.constant 0.000000e+00 : f32
    %10 = vector.broadcast %cst_7 : f32 to vector<1x30xf32>
    %11 = vector.extract_strided_slice %7 {offsets = [0, 0], sizes = [1, 120], strides = [1, 1]} : vector<8x120xf32> to vector<1x120xf32>
    %cst_8 = arith.constant dense<0.000000e+00> : vector<1x120xf32>
    %12 = tpu.matmul %9, %8, %cst_8 {dimension_numbers = #tpu.dot_dimension_numbers<[1], [0], [0], [1], [0, 0, 1, 1], [], []>} : vector<1x30xf32>, vector<30x120xf32>, vector<1x120xf32> -> vector<1x120xf32>
    %13 = arith.addf %11, %12 : vector<1x120xf32>
    %14 = arith.negf %13 : vector<1x120xf32>
    %15 = math.exp %14 : vector<1x120xf32>
    %cst_9 = arith.constant 1.000000e+00 : f32
    %16 = vector.broadcast %cst_9 : f32 to vector<1x120xf32>
    %17 = arith.addf %16, %15 : vector<1x120xf32>
    %18 = arith.divf %16, %17 : vector<1x120xf32>
    %19 = math.tanh %13 : vector<1x120xf32>
    %20 = vector.extract_strided_slice %18 {offsets = [0, 0], sizes = [1, 30], strides = [1, 1]} : vector<1x120xf32> to vector<1x30xf32>
    %21 = vector.extract_strided_slice %18 {offsets = [0, 30], sizes = [1, 30], strides = [1, 1]} : vector<1x120xf32> to vector<1x30xf32>
    %22 = vector.extract_strided_slice %19 {offsets = [0, 60], sizes = [1, 30], strides = [1, 1]} : vector<1x120xf32> to vector<1x30xf32>
    %23 = vector.extract_strided_slice %18 {offsets = [0, 90], sizes = [1, 30], strides = [1, 1]} : vector<1x120xf32> to vector<1x30xf32>
    %24 = arith.mulf %21, %10 : vector<1x30xf32>
    %25 = arith.mulf %20, %22 : vector<1x30xf32>
    %26 = arith.addf %24, %25 : vector<1x30xf32>
    %27 = math.tanh %26 : vector<1x30xf32>
    %28 = arith.mulf %23, %27 : vector<1x30xf32>
    %29 = vector.extract_strided_slice %7 {offsets = [1, 0], sizes = [1, 120], strides = [1, 1]} : vector<8x120xf32> to vector<1x120xf32>
    %cst_10 = arith.constant dense<0.000000e+00> : vector<1x120xf32>
    %30 = tpu.matmul %28, %8, %cst_10 {dimension_numbers = #tpu.dot_dimension_numbers<[1], [0], [0], [1], [0, 0, 1, 1], [], []>} : vector<1x30xf32>, vector<30x120xf32>, vector<1x120xf32> -> vector<1x120xf32>
    %31 = arith.addf %29, %30 : vector<1x120xf32>
    %32 = arith.negf %31 : vector<1x120xf32>
    %33 = math.exp %32 : vector<1x120xf32>
    %cst_11 = arith.constant 1.000000e+00 : f32
    %34 = vector.broadcast %cst_11 : f32 to vector<1x120xf32>
    %35 = arith.addf %34, %33 : vector<1x120xf32>
    %36 = arith.divf %34, %35 : vector<1x120xf32>
    %37 = math.tanh %31 : vector<1x120xf32>
    %38 = vector.extract_strided_slice %36 {offsets = [0, 0], sizes = [1, 30], strides = [1, 1]} : vector<1x120xf32> to vector<1x30xf32>
    %39 = vector.extract_strided_slice %36 {offsets = [0, 30], sizes = [1, 30], strides = [1, 1]} : vector<1x120xf32> to vector<1x30xf32>
    %40 = vector.extract_strided_slice %37 {offsets = [0, 60], sizes = [1, 30], strides = [1, 1]} : vector<1x120xf32> to vector<1x30xf32>
    %41 = vector.extract_strided_slice %36 {offsets = [0, 90], sizes = [1, 30], strides = [1, 1]} : vector<1x120xf32> to vector<1x30xf32>
    %42 = arith.mulf %39, %26 : vector<1x30xf32>
    %43 = arith.mulf %38, %40 : vector<1x30xf32>
    %44 = arith.addf %42, %43 : vector<1x30xf32>
    %45 = math.tanh %44 : vector<1x30xf32>
    %46 = arith.mulf %41, %45 : vector<1x30xf32>
    %47 = vector.extract_strided_slice %7 {offsets = [2, 0], sizes = [1, 120], strides = [1, 1]} : vector<8x120xf32> to vector<1x120xf32>
    %cst_12 = arith.constant dense<0.000000e+00> : vector<1x120xf32>
    %48 = tpu.matmul %46, %8, %cst_12 {dimension_numbers = #tpu.dot_dimension_numbers<[1], [0], [0], [1], [0, 0, 1, 1], [], []>} : vector<1x30xf32>, vector<30x120xf32>, vector<1x120xf32> -> vector<1x120xf32>
    %49 = arith.addf %47, %48 : vector<1x120xf32>
    %50 = arith.negf %49 : vector<1x120xf32>
    %51 = math.exp %50 : vector<1x120xf32>
    %cst_13 = arith.constant 1.000000e+00 : f32
    %52 = vector.broadcast %cst_13 : f32 to vector<1x120xf32>
    %53 = arith.addf %52, %51 : vector<1x120xf32>
    %54 = arith.divf %52, %53 : vector<1x120xf32>
    %55 = math.tanh %49 : vector<1x120xf32>
    %56 = vector.extract_strided_slice %54 {offsets = [0, 0], sizes = [1, 30], strides = [1, 1]} : vector<1x120xf32> to vector<1x30xf32>
    %57 = vector.extract_strided_slice %54 {offsets = [0, 30], sizes = [1, 30], strides = [1, 1]} : vector<1x120xf32> to vector<1x30xf32>
    %58 = vector.extract_strided_slice %55 {offsets = [0, 60], sizes = [1, 30], strides = [1, 1]} : vector<1x120xf32> to vector<1x30xf32>
    %59 = vector.extract_strided_slice %54 {offsets = [0, 90], sizes = [1, 30], strides = [1, 1]} : vector<1x120xf32> to vector<1x30xf32>
    %60 = arith.mulf %57, %44 : vector<1x30xf32>
    %61 = arith.mulf %56, %58 : vector<1x30xf32>
    %62 = arith.addf %60, %61 : vector<1x30xf32>
    %63 = math.tanh %62 : vector<1x30xf32>
    %64 = arith.mulf %59, %63 : vector<1x30xf32>
    %65 = vector.extract_strided_slice %7 {offsets = [3, 0], sizes = [1, 120], strides = [1, 1]} : vector<8x120xf32> to vector<1x120xf32>
    %cst_14 = arith.constant dense<0.000000e+00> : vector<1x120xf32>
    %66 = tpu.matmul %64, %8, %cst_14 {dimension_numbers = #tpu.dot_dimension_numbers<[1], [0], [0], [1], [0, 0, 1, 1], [], []>} : vector<1x30xf32>, vector<30x120xf32>, vector<1x120xf32> -> vector<1x120xf32>
    %67 = arith.addf %65, %66 : vector<1x120xf32>
    %68 = arith.negf %67 : vector<1x120xf32>
    %69 = math.exp %68 : vector<1x120xf32>
    %cst_15 = arith.constant 1.000000e+00 : f32
    %70 = vector.broadcast %cst_15 : f32 to vector<1x120xf32>
    %71 = arith.addf %70, %69 : vector<1x120xf32>
    %72 = arith.divf %70, %71 : vector<1x120xf32>
    %73 = math.tanh %67 : vector<1x120xf32>
    %74 = vector.extract_strided_slice %72 {offsets = [0, 0], sizes = [1, 30], strides = [1, 1]} : vector<1x120xf32> to vector<1x30xf32>
    %75 = vector.extract_strided_slice %72 {offsets = [0, 30], sizes = [1, 30], strides = [1, 1]} : vector<1x120xf32> to vector<1x30xf32>
    %76 = vector.extract_strided_slice %73 {offsets = [0, 60], sizes = [1, 30], strides = [1, 1]} : vector<1x120xf32> to vector<1x30xf32>
    %77 = vector.extract_strided_slice %72 {offsets = [0, 90], sizes = [1, 30], strides = [1, 1]} : vector<1x120xf32> to vector<1x30xf32>
    %78 = arith.mulf %75, %62 : vector<1x30xf32>
    %79 = arith.mulf %74, %76 : vector<1x30xf32>
    %80 = arith.addf %78, %79 : vector<1x30xf32>
    %81 = math.tanh %80 : vector<1x30xf32>
    %82 = arith.mulf %77, %81 : vector<1x30xf32>
    %83 = vector.extract_strided_slice %7 {offsets = [4, 0], sizes = [1, 120], strides = [1, 1]} : vector<8x120xf32> to vector<1x120xf32>
    %cst_16 = arith.constant dense<0.000000e+00> : vector<1x120xf32>
    %84 = tpu.matmul %82, %8, %cst_16 {dimension_numbers = #tpu.dot_dimension_numbers<[1], [0], [0], [1], [0, 0, 1, 1], [], []>} : vector<1x30xf32>, vector<30x120xf32>, vector<1x120xf32> -> vector<1x120xf32>
    %85 = arith.addf %83, %84 : vector<1x120xf32>
    %86 = arith.negf %85 : vector<1x120xf32>
    %87 = math.exp %86 : vector<1x120xf32>
    %cst_17 = arith.constant 1.000000e+00 : f32
    %88 = vector.broadcast %cst_17 : f32 to vector<1x120xf32>
    %89 = arith.addf %88, %87 : vector<1x120xf32>
    %90 = arith.divf %88, %89 : vector<1x120xf32>
    %91 = math.tanh %85 : vector<1x120xf32>
    %92 = vector.extract_strided_slice %90 {offsets = [0, 0], sizes = [1, 30], strides = [1, 1]} : vector<1x120xf32> to vector<1x30xf32>
    %93 = vector.extract_strided_slice %90 {offsets = [0, 30], sizes = [1, 30], strides = [1, 1]} : vector<1x120xf32> to vector<1x30xf32>
    %94 = vector.extract_strided_slice %91 {offsets = [0, 60], sizes = [1, 30], strides = [1, 1]} : vector<1x120xf32> to vector<1x30xf32>
    %95 = vector.extract_strided_slice %90 {offsets = [0, 90], sizes = [1, 30], strides = [1, 1]} : vector<1x120xf32> to vector<1x30xf32>
    %96 = arith.mulf %93, %80 : vector<1x30xf32>
    %97 = arith.mulf %92, %94 : vector<1x30xf32>
    %98 = arith.addf %96, %97 : vector<1x30xf32>
    %99 = math.tanh %98 : vector<1x30xf32>
    %100 = arith.mulf %95, %99 : vector<1x30xf32>
    %101 = vector.extract_strided_slice %7 {offsets = [5, 0], sizes = [1, 120], strides = [1, 1]} : vector<8x120xf32> to vector<1x120xf32>
    %cst_18 = arith.constant dense<0.000000e+00> : vector<1x120xf32>
    %102 = tpu.matmul %100, %8, %cst_18 {dimension_numbers = #tpu.dot_dimension_numbers<[1], [0], [0], [1], [0, 0, 1, 1], [], []>} : vector<1x30xf32>, vector<30x120xf32>, vector<1x120xf32> -> vector<1x120xf32>
    %103 = arith.addf %101, %102 : vector<1x120xf32>
    %104 = arith.negf %103 : vector<1x120xf32>
    %105 = math.exp %104 : vector<1x120xf32>
    %cst_19 = arith.constant 1.000000e+00 : f32
    %106 = vector.broadcast %cst_19 : f32 to vector<1x120xf32>
    %107 = arith.addf %106, %105 : vector<1x120xf32>
    %108 = arith.divf %106, %107 : vector<1x120xf32>
    %109 = math.tanh %103 : vector<1x120xf32>
    %110 = vector.extract_strided_slice %108 {offsets = [0, 0], sizes = [1, 30], strides = [1, 1]} : vector<1x120xf32> to vector<1x30xf32>
    %111 = vector.extract_strided_slice %108 {offsets = [0, 30], sizes = [1, 30], strides = [1, 1]} : vector<1x120xf32> to vector<1x30xf32>
    %112 = vector.extract_strided_slice %109 {offsets = [0, 60], sizes = [1, 30], strides = [1, 1]} : vector<1x120xf32> to vector<1x30xf32>
    %113 = vector.extract_strided_slice %108 {offsets = [0, 90], sizes = [1, 30], strides = [1, 1]} : vector<1x120xf32> to vector<1x30xf32>
    %114 = arith.mulf %111, %98 : vector<1x30xf32>
    %115 = arith.mulf %110, %112 : vector<1x30xf32>
    %116 = arith.addf %114, %115 : vector<1x30xf32>
    %117 = math.tanh %116 : vector<1x30xf32>
    %118 = arith.mulf %113, %117 : vector<1x30xf32>
    %119 = vector.extract_strided_slice %7 {offsets = [6, 0], sizes = [1, 120], strides = [1, 1]} : vector<8x120xf32> to vector<1x120xf32>
    %cst_20 = arith.constant dense<0.000000e+00> : vector<1x120xf32>
    %120 = tpu.matmul %118, %8, %cst_20 {dimension_numbers = #tpu.dot_dimension_numbers<[1], [0], [0], [1], [0, 0, 1, 1], [], []>} : vector<1x30xf32>, vector<30x120xf32>, vector<1x120xf32> -> vector<1x120xf32>
    %121 = arith.addf %119, %120 : vector<1x120xf32>
    %122 = arith.negf %121 : vector<1x120xf32>
    %123 = math.exp %122 : vector<1x120xf32>
    %cst_21 = arith.constant 1.000000e+00 : f32
    %124 = vector.broadcast %cst_21 : f32 to vector<1x120xf32>
    %125 = arith.addf %124, %123 : vector<1x120xf32>
    %126 = arith.divf %124, %125 : vector<1x120xf32>
    %127 = math.tanh %121 : vector<1x120xf32>
    %128 = vector.extract_strided_slice %126 {offsets = [0, 0], sizes = [1, 30], strides = [1, 1]} : vector<1x120xf32> to vector<1x30xf32>
    %129 = vector.extract_strided_slice %126 {offsets = [0, 30], sizes = [1, 30], strides = [1, 1]} : vector<1x120xf32> to vector<1x30xf32>
    %130 = vector.extract_strided_slice %127 {offsets = [0, 60], sizes = [1, 30], strides = [1, 1]} : vector<1x120xf32> to vector<1x30xf32>
    %131 = vector.extract_strided_slice %126 {offsets = [0, 90], sizes = [1, 30], strides = [1, 1]} : vector<1x120xf32> to vector<1x30xf32>
    %132 = arith.mulf %129, %116 : vector<1x30xf32>
    %133 = arith.mulf %128, %130 : vector<1x30xf32>
    %134 = arith.addf %132, %133 : vector<1x30xf32>
    %135 = math.tanh %134 : vector<1x30xf32>
    %136 = arith.mulf %131, %135 : vector<1x30xf32>
    %137 = vector.extract_strided_slice %7 {offsets = [7, 0], sizes = [1, 120], strides = [1, 1]} : vector<8x120xf32> to vector<1x120xf32>
    %cst_22 = arith.constant dense<0.000000e+00> : vector<1x120xf32>
    %138 = tpu.matmul %136, %8, %cst_22 {dimension_numbers = #tpu.dot_dimension_numbers<[1], [0], [0], [1], [0, 0, 1, 1], [], []>} : vector<1x30xf32>, vector<30x120xf32>, vector<1x120xf32> -> vector<1x120xf32>
    %139 = arith.addf %137, %138 : vector<1x120xf32>
    %140 = arith.negf %139 : vector<1x120xf32>
    %141 = math.exp %140 : vector<1x120xf32>
    %cst_23 = arith.constant 1.000000e+00 : f32
    %142 = vector.broadcast %cst_23 : f32 to vector<1x120xf32>
    %143 = arith.addf %142, %141 : vector<1x120xf32>
    %144 = arith.divf %142, %143 : vector<1x120xf32>
    %145 = math.tanh %139 : vector<1x120xf32>
    %146 = vector.extract_strided_slice %144 {offsets = [0, 0], sizes = [1, 30], strides = [1, 1]} : vector<1x120xf32> to vector<1x30xf32>
    %147 = vector.extract_strided_slice %144 {offsets = [0, 30], sizes = [1, 30], strides = [1, 1]} : vector<1x120xf32> to vector<1x30xf32>
    %148 = vector.extract_strided_slice %145 {offsets = [0, 60], sizes = [1, 30], strides = [1, 1]} : vector<1x120xf32> to vector<1x30xf32>
    %149 = vector.extract_strided_slice %144 {offsets = [0, 90], sizes = [1, 30], strides = [1, 1]} : vector<1x120xf32> to vector<1x30xf32>
    %150 = arith.mulf %147, %134 : vector<1x30xf32>
    %151 = arith.mulf %146, %148 : vector<1x30xf32>
    %152 = arith.addf %150, %151 : vector<1x30xf32>
    %153 = math.tanh %152 : vector<1x30xf32>
    %154 = arith.mulf %149, %153 : vector<1x30xf32>
    %c0_24 = arith.constant 0 : index
    %c0_25 = arith.constant 0 : index
    %155 = vector.load %arg4[%c0_24, %c0_25] : memref<1x30xf32, #tpu.memory_space<vmem>>, vector<1x30xf32>
    %156 = arith.mulf %154, %155 : vector<1x30xf32>
    %cst_26 = arith.constant dense<0.000000e+00> : vector<1xf32>
    %157 = vector.multi_reduction <add>, %156, %cst_26 [1] : vector<1x30xf32> to vector<1xf32>
    %158 = vector.shape_cast %157 : vector<1xf32> to vector<1x1xf32>
    %c0_27 = arith.constant 0 : index
    %c0_28 = arith.constant 0 : index
    %159 = vector.load %arg5[%c0_27, %c0_28] : memref<1x1xf32, #tpu.memory_space<vmem>>, vector<1x1xf32>
    %160 = arith.addf %158, %159 : vector<1x1xf32>
    %c0_29 = arith.constant 0 : index
    %c0_30 = arith.constant 0 : index
    %161 = vector.load %arg6[%c0_29, %c0_30] : memref<1x1xf32, #tpu.memory_space<vmem>>, vector<1x1xf32>
    tpu.vector_store %arg6[%c0_29, %c0_30], %160 {strides = array<i32>} : memref<1x1xf32, #tpu.memory_space<vmem>>, vector<1x1xf32>,
    return
  }
}

</mosaic_0001>

<llo_original>
// kernel: tpu_custom_call.1
$region0: #{tpu_custom_call.1}
  #allocation0 [shape = 'u32[]', space=smem, size = 0x4, offset = 0x4, fixed_abs, tag = 'smem constant byte address 0x4 - core index']
  #allocation1 [shape = 'u32[72,128]{1,0:T(1,128)}', space=vmem, size = 0x9000, scoped, tag = 'internal scratch']
  #allocation2 [shape = 'f32[1,1]{1,0:T(1,128)S(1)}', space=vmem, size = 0x200, scoped, tag = 'scoped memory for tpu_custom_call.1']
  %s0 = inlined_call_operand.vmem [shape: f32[8,1], index: 0, kind: input, shape index: {}]
  %s1 = inlined_call_operand.vmem [shape: f32[1,120], index: 1, kind: input, shape index: {}]
  %s2 = inlined_call_operand.hbm [shape: f32[30,120], index: 2, kind: input, shape index: {}]
  %s3 = inlined_call_operand.vmem [shape: f32[1,120], index: 3, kind: input, shape index: {}]
  %s4 = inlined_call_operand.vmem [shape: f32[1,30], index: 4, kind: input, shape index: {}]
  %s5 = inlined_call_operand.<no memory space> [shape: f32[1,1], index: 5, kind: input, shape index: {}]
  %s6 = inlined_call_operand.hbm [shape: f32[1,1], index: 6, kind: output, shape index: {}]
  %s7 = sld [smem:[#allocation0]]
  $region38: #{tpu_custom_call.1} parent=0
    _
  %s9 = ssub.s32 1, %s7
  %s10 = scalar_select 0, %s9, %s7
  %v11 = vstv %s5
  %12 = vst [vmem:[#allocation2] sm:$0x1] %v11
  $region1: #{tpu_custom_call.1} parent=0
    #allocation3 [shape = 'u8[16384]{0}', space=vmem, size = 0x4000, scoped, tag = 'input window, operand 2, single buffered']
    #allocation4 [shape = 's32[1]{0}', space=sflag, size = 0x4, scoped, tag = 'scoped memory for tpu_custom_call.1']
    #allocation5 [shape = 's32[1]{0}', space=sflag, size = 0x4, scoped, tag = 'scoped memory for tpu_custom_call.1']
    #allocation6 [shape = 'u8[512]{0}', space=vmem, size = 0x400, scoped, tag = 'output window, operand 0, single buffered']
    %13 = vsyncpa [#allocation4], 0
    %14 = vsyncpa [#allocation5], 0
    // Predicated region
    $region2: #{tpu_custom_call.1} parent=1 // pred_check
      _
    $region3: #{tpu_custom_call.1} parent=1 // pred_check_branch
      %16 = sbr.rel (0) target = $region5
    $region4: #{tpu_custom_call.1} parent=1 // pred_region
      _
    $region5: #{tpu_custom_call.1} parent=1 // pred_fallthru
      _
    // Predicated region
    $region6: #{tpu_custom_call.1} parent=1 // pred_check
      _
    $region7: #{tpu_custom_call.1} parent=1 // pred_check_branch
      %18 = sbr.rel (0) target = $region9
    $region8: #{tpu_custom_call.1} parent=1 // pred_region
      _
    $region9: #{tpu_custom_call.1} parent=1 // pred_fallthru
      _
    // Predicated region
    $region10: #{tpu_custom_call.1} parent=1 // pred_check
      _
    $region11: #{tpu_custom_call.1} parent=1 // pred_check_branch
      %20 = sbr.rel (0) target = $region13
    $region12: #{tpu_custom_call.1} parent=1 // pred_region
      %22 = vsyncadd [#allocation4], 0
      %s23 = sshll.u32 %s2, 4
      %s24 = int_to_ptr.hbm [resolvable:$true] %s23
      %s25 = sshll.u32 [#allocation3], 4
      %s26 = int_to_ptr.vmem [resolvable:$true] %s25
      %31 = dma.hbm_to_vmem [thread:$0]  %s24, 512, %s26, [#allocation4], 128, 128, 8
    $region13: #{tpu_custom_call.1} parent=1 // pred_fallthru
      _
    // Predicated region
    $region14: #{tpu_custom_call.1} parent=1 // pred_check
      _
    $region15: #{tpu_custom_call.1} parent=1 // pred_check_branch
      %33 = sbr.rel (0) target = $region17
    $region16: #{tpu_custom_call.1} parent=1 // pred_region
      _
    $region17: #{tpu_custom_call.1} parent=1 // pred_fallthru
      _
    // Predicated region
    $region18: #{tpu_custom_call.1} parent=1 // pred_check
      _
    $region19: #{tpu_custom_call.1} parent=1 // pred_check_branch
      %35 = sbr.rel (0) target = $region21
    $region20: #{tpu_custom_call.1} parent=1 // pred_region
      _
    $region21: #{tpu_custom_call.1} parent=1 // pred_fallthru
      _
    // Predicated region
    $region22: #{tpu_custom_call.1} parent=1 // pred_check
      _
    $region23: #{tpu_custom_call.1} parent=1 // pred_check_branch
      %37 = sbr.rel (0) target = $region25
    $region24: #{tpu_custom_call.1} parent=1 // pred_region
      _
    $region25: #{tpu_custom_call.1} parent=1 // pred_fallthru
      _
    // Predicated region
    $region26: #{tpu_custom_call.1} parent=1 // pred_check
      _
    $region27: #{tpu_custom_call.1} parent=1 // pred_check_branch
      %39 = sbr.rel (0) target = $region29
    $region28: #{tpu_custom_call.1} parent=1 // pred_region
      %41 = dma.done [#allocation4], 512
    $region29: #{tpu_custom_call.1} parent=1 // pred_fallthru
      _
    %v42 = vld [vmem:[%s0] sm:$0xff]
    %v43 = vld [vmem:[%s1] sm:$0x1]
    %45 = vset.pattern.permute.xlu0 0
    %46 = vperm.xlu0 %45, %v42
    %v47 = vpop.permute.xlu0 %46
    %v50 = vperm.slane %v43, 0
    %v52 = vmul.f32 %v47, %v50
    %v53 = vld [vmem:[%s3] sm:$0x1]
    %v55 = vperm.slane %v53, 0
    %v57 = vadd.f32 %v52, %v55
    %v58 = vld [vmem:[#allocation3] sm:$0xff]
    %v59 = vld [vmem:[#allocation3 + $0x8] sm:$0xff]
    %v60 = vld [vmem:[#allocation3 + $0x10] sm:$0xff]
    %v61 = vld [vmem:[#allocation3 + $0x18] sm:$0x3f]
    %vm62 = vcmask 244736
    %v64 = vsel %vm62, 0.0, 0
    %vm66 = vcmask 1045504
    %v68 = vsel %vm66, %v61, 0
    %70 = vmatpush.msra.mxu0 0.0
    %71 = vmatpush.msra.mxu0 0.0
    %72 = vmatpush.msra.mxu0 0.0
    %73 = vmatpush.msra.mxu0 0.0
    %74 = vmatpush.msra.mxu0 0.0
    %75 = vmatpush.msra.mxu0 0.0
    %76 = vmatpush.msra.mxu0 0.0
    %77 = vmatpush.msra.mxu0 0.0
    %78 = vmatpush.msra.mxu0 0.0
    %79 = vmatpush.msra.mxu0 0.0
    %80 = vmatpush.msra.mxu0 0.0
    %81 = vmatpush.msra.mxu0 0.0
    %82 = vmatpush.msra.mxu0 %v68
    %83 = vmatpush.msra.mxu0 %v60
    %84 = vmatpush.msra.mxu0 %v59
    %85 = vmatpush.msra.mxu0 %v58
    %86 = vmatmul.f32.gmra.mxu0 %v64
    %v87 = vpop.f32.mrf.mxu0
    %v88 = vadd.f32 0.0, %v87
    %89 = vdwg.mxu0
    %v90 = vadd.f32 %v57, %v88
    %v91 = vxor.u32 %v90, 2147483648
    %v92 = vmul.f32 %v91, 1.442695
    %v93 = vpow.pop %v92
    %v94 = vadd.f32 %v93, 1.0
    %v95 = vrcp.pop %v94
    %v96 = vmul.f32 %v94, %v95
    %v97 = vsub.f32 1.0, %v96
    %v98 = vmul.f32 %v95, %v97
    %v99 = vadd.f32 %v95, %v98
    %vm100 = vweird.f32 %v94
    %vm101 = vweird.f32 %v95
    %vm102 = vmor %vm100, %vm101
    %v103 = vsel %vm102, %v95, %v99
    %v104 = vand.u32 2147483647, %v94
    %vm105 = vcmp.eq.f32.partialorder %v104, 8.507059e+37
    %v106 = vand.u32 %v94, 2147483648
    %v107 = vor.u32 1.1754944e-38, %v106
    %v108 = vsel %vm105, %v107, %v103
    %v109 = vmul.f32 1.0, %v108
    %v110 = vtanh.pop %v90
    %v111 = vmul.f32 %v109, 0.0
    %113 = vrot.lane.b32.xlu0 %v110, 68
    %v114 = vpop.permute.xlu0 %113
    %v116 = vmul.f32 %v109, %v114
    %118 = vrot.lane.b32.xlu0 %v116, 30
    %v119 = vpop.permute.xlu0 %118
    %v121 = vadd.f32 %v111, %v119
    %v122 = vtanh.pop %v121
    %124 = vrot.lane.b32.xlu0 %v122, 60
    %v125 = vpop.permute.xlu0 %124
    %v127 = vmul.f32 %v109, %v125
    %129 = vrot.lane.b32.xlu0 %v127, 38
    %v130 = vpop.permute.xlu0 %129
    %v131 = vsel %vm62, %v130, 0
    %133 = vmatpush.msra.mxu0 0.0
    %134 = vmatpush.msra.mxu0 0.0
    %135 = vmatpush.msra.mxu0 0.0
    %136 = vmatpush.msra.mxu0 0.0
    %137 = vmatpush.msra.mxu0 0.0
    %138 = vmatpush.msra.mxu0 0.0
    %139 = vmatpush.msra.mxu0 0.0
    %140 = vmatpush.msra.mxu0 0.0
    %141 = vmatpush.msra.mxu0 0.0
    %142 = vmatpush.msra.mxu0 0.0
    %143 = vmatpush.msra.mxu0 0.0
    %144 = vmatpush.msra.mxu0 0.0
    %145 = vmatpush.msra.mxu0 %v68
    %146 = vmatpush.msra.mxu0 %v60
    %147 = vmatpush.msra.mxu0 %v59
    %148 = vmatpush.msra.mxu0 %v58
    %149 = vmatmul.f32.gmra.mxu0 %v131
    %v150 = vpop.f32.mrf.mxu0
    %v151 = vadd.f32 0.0, %v150
    %152 = vdwg.mxu0
    %v154 = vrot.slane %v151, 7
    %v156 = vadd.f32 %v57, %v154
    %v157 = vxor.u32 %v156, 2147483648
    %v158 = vmul.f32 %v157, 1.442695
    %v159 = vpow.pop %v158
    %v160 = vadd.f32 %v159, 1.0
    %v161 = vrcp.pop %v160
    %v162 = vmul.f32 %v160, %v161
    %v163 = vsub.f32 1.0, %v162
    %v164 = vmul.f32 %v161, %v163
    %v165 = vadd.f32 %v161, %v164
    %vm166 = vweird.f32 %v160
    %vm167 = vweird.f32 %v161
    %vm168 = vmor %vm166, %vm167
    %v169 = vsel %vm168, %v161, %v165
    %v170 = vand.u32 2147483647, %v160
    %vm171 = vcmp.eq.f32.partialorder %v170, 8.507059e+37
    %v172 = vand.u32 %v160, 2147483648
    %v173 = vor.u32 1.1754944e-38, %v172
    %v174 = vsel %vm171, %v173, %v169
    %v175 = vmul.f32 1.0, %v174
    %v176 = vtanh.pop %v156
    %v178 = vrot.slane %v121, 7
    %v180 = vmul.f32 %v175, %v178
    %182 = vrot.lane.b32.xlu0 %v176, 68
    %v183 = vpop.permute.xlu0 %182
    %v185 = vmul.f32 %v175, %v183
    %187 = vrot.lane.b32.xlu0 %v185, 30
    %v188 = vpop.permute.xlu0 %187
    %v190 = vadd.f32 %v180, %v188
    %v191 = vtanh.pop %v190
    %193 = vrot.lane.b32.xlu0 %v191, 60
    %v194 = vpop.permute.xlu0 %193
    %v196 = vmul.f32 %v175, %v194
    %v198 = vrot.slane %v196, 1
    %199 = vrot.lane.b32.xlu0 %v198, 38
    %v200 = vpop.permute.xlu0 %199
    %v201 = vsel %vm62, %v200, 0
    %203 = vmatpush.msra.mxu0 0.0
    %204 = vmatpush.msra.mxu0 0.0
    %205 = vmatpush.msra.mxu0 0.0
    %206 = vmatpush.msra.mxu0 0.0
    %207 = vmatpush.msra.mxu0 0.0
    %208 = vmatpush.msra.mxu0 0.0
    %209 = vmatpush.msra.mxu0 0.0
    %210 = vmatpush.msra.mxu0 0.0
    %211 = vmatpush.msra.mxu0 0.0
    %212 = vmatpush.msra.mxu0 0.0
    %213 = vmatpush.msra.mxu0 0.0
    %214 = vmatpush.msra.mxu0 0.0
    %215 = vmatpush.msra.mxu0 %v68
    %216 = vmatpush.msra.mxu0 %v60
    %217 = vmatpush.msra.mxu0 %v59
    %218 = vmatpush.msra.mxu0 %v58
    %219 = vmatmul.f32.gmra.mxu0 %v201
    %v220 = vpop.f32.mrf.mxu0
    %v221 = vadd.f32 0.0, %v220
    %222 = vdwg.mxu0
    %v224 = vrot.slane %v221, 6
    %v226 = vadd.f32 %v57, %v224
    %v227 = vxor.u32 %v226, 2147483648
    %v228 = vmul.f32 %v227, 1.442695
    %v229 = vpow.pop %v228
    %v230 = vadd.f32 %v229, 1.0
    %v231 = vrcp.pop %v230
    %v232 = vmul.f32 %v230, %v231
    %v233 = vsub.f32 1.0, %v232
    %v234 = vmul.f32 %v231, %v233
    %v235 = vadd.f32 %v231, %v234
    %vm236 = vweird.f32 %v230
    %vm237 = vweird.f32 %v231
    %vm238 = vmor %vm236, %vm237
    %v239 = vsel %vm238, %v231, %v235
    %v240 = vand.u32 2147483647, %v230
    %vm241 = vcmp.eq.f32.partialorder %v240, 8.507059e+37
    %v242 = vand.u32 %v230, 2147483648
    %v243 = vor.u32 1.1754944e-38, %v242
    %v244 = vsel %vm241, %v243, %v239
    %v245 = vmul.f32 1.0, %v244
    %v246 = vtanh.pop %v226
    %v248 = vrot.slane %v190, 7
    %v250 = vmul.f32 %v245, %v248
    %252 = vrot.lane.b32.xlu0 %v246, 68
    %v253 = vpop.permute.xlu0 %252
    %v255 = vmul.f32 %v245, %v253
    %257 = vrot.lane.b32.xlu0 %v255, 30
    %v258 = vpop.permute.xlu0 %257
    %v260 = vadd.f32 %v250, %v258
    %v261 = vtanh.pop %v260
    %263 = vrot.lane.b32.xlu0 %v261, 60
    %v264 = vpop.permute.xlu0 %263
    %v266 = vmul.f32 %v245, %v264
    %v268 = vrot.slane %v266, 2
    %269 = vrot.lane.b32.xlu0 %v268, 38
    %v270 = vpop.permute.xlu0 %269
    %v271 = vsel %vm62, %v270, 0
    %273 = vmatpush.msra.mxu0 0.0
    %274 = vmatpush.msra.mxu0 0.0
    %275 = vmatpush.msra.mxu0 0.0
    %276 = vmatpush.msra.mxu0 0.0
    %277 = vmatpush.msra.mxu0 0.0
    %278 = vmatpush.msra.mxu0 0.0
    %279 = vmatpush.msra.mxu0 0.0
    %280 = vmatpush.msra.mxu0 0.0
    %281 = vmatpush.msra.mxu0 0.0
    %282 = vmatpush.msra.mxu0 0.0
    %283 = vmatpush.msra.mxu0 0.0
    %284 = vmatpush.msra.mxu0 0.0
    %285 = vmatpush.msra.mxu0 %v68
    %286 = vmatpush.msra.mxu0 %v60
    %287 = vmatpush.msra.mxu0 %v59
    %288 = vmatpush.msra.mxu0 %v58
    %289 = vmatmul.f32.gmra.mxu0 %v271
    %v290 = vpop.f32.mrf.mxu0
    %v291 = vadd.f32 0.0, %v290
    %292 = vdwg.mxu0
    %v294 = vrot.slane %v291, 5
    %v296 = vadd.f32 %v57, %v294
    %v297 = vxor.u32 %v296, 2147483648
    %v298 = vmul.f32 %v297, 1.442695
    %v299 = vpow.pop %v298
    %v300 = vadd.f32 %v299, 1.0
    %v301 = vrcp.pop %v300
    %v302 = vmul.f32 %v300, %v301
    %v303 = vsub.f32 1.0, %v302
    %v304 = vmul.f32 %v301, %v303
    %v305 = vadd.f32 %v301, %v304
    %vm306 = vweird.f32 %v300
    %vm307 = vweird.f32 %v301
    %vm308 = vmor %vm306, %vm307
    %v309 = vsel %vm308, %v301, %v305
    %v310 = vand.u32 2147483647, %v300
    %vm311 = vcmp.eq.f32.partialorder %v310, 8.507059e+37
    %v312 = vand.u32 %v300, 2147483648
    %v313 = vor.u32 1.1754944e-38, %v312
    %v314 = vsel %vm311, %v313, %v309
    %v315 = vmul.f32 1.0, %v314
    %v316 = vtanh.pop %v296
    %v318 = vrot.slane %v260, 7
    %v320 = vmul.f32 %v315, %v318
    %322 = vrot.lane.b32.xlu0 %v316, 68
    %v323 = vpop.permute.xlu0 %322
    %v325 = vmul.f32 %v315, %v323
    %327 = vrot.lane.b32.xlu0 %v325, 30
    %v328 = vpop.permute.xlu0 %327
    %v330 = vadd.f32 %v320, %v328
    %v331 = vtanh.pop %v330
    %333 = vrot.lane.b32.xlu0 %v331, 60
    %v334 = vpop.permute.xlu0 %333
    %v336 = vmul.f32 %v315, %v334
    %v338 = vrot.slane %v336, 3
    %339 = vrot.lane.b32.xlu0 %v338, 38
    %v340 = vpop.permute.xlu0 %339
    %v341 = vsel %vm62, %v340, 0
    %343 = vmatpush.msra.mxu0 0.0
    %344 = vmatpush.msra.mxu0 0.0
    %345 = vmatpush.msra.mxu0 0.0
    %346 = vmatpush.msra.mxu0 0.0
    %347 = vmatpush.msra.mxu0 0.0
    %348 = vmatpush.msra.mxu0 0.0
    %349 = vmatpush.msra.mxu0 0.0
    %350 = vmatpush.msra.mxu0 0.0
    %351 = vmatpush.msra.mxu0 0.0
    %352 = vmatpush.msra.mxu0 0.0
    %353 = vmatpush.msra.mxu0 0.0
    %354 = vmatpush.msra.mxu0 0.0
    %355 = vmatpush.msra.mxu0 %v68
    %356 = vmatpush.msra.mxu0 %v60
    %357 = vmatpush.msra.mxu0 %v59
    %358 = vmatpush.msra.mxu0 %v58
    %359 = vmatmul.f32.gmra.mxu0 %v341
    %v360 = vpop.f32.mrf.mxu0
    %v361 = vadd.f32 0.0, %v360
    %362 = vdwg.mxu0
    %v364 = vrot.slane %v361, 4
    %v366 = vadd.f32 %v57, %v364
    %v367 = vxor.u32 %v366, 2147483648
    %v368 = vmul.f32 %v367, 1.442695
    %v369 = vpow.pop %v368
    %v370 = vadd.f32 %v369, 1.0
    %v371 = vrcp.pop %v370
    %v372 = vmul.f32 %v370, %v371
    %v373 = vsub.f32 1.0, %v372
    %v374 = vmul.f32 %v371, %v373
    %v375 = vadd.f32 %v371, %v374
    %vm376 = vweird.f32 %v370
    %vm377 = vweird.f32 %v371
    %vm378 = vmor %vm376, %vm377
    %v379 = vsel %vm378, %v371, %v375
    %v380 = vand.u32 2147483647, %v370
    %vm381 = vcmp.eq.f32.partialorder %v380, 8.507059e+37
    %v382 = vand.u32 %v370, 2147483648
    %v383 = vor.u32 1.1754944e-38, %v382
    %v384 = vsel %vm381, %v383, %v379
    %v385 = vmul.f32 1.0, %v384
    %v386 = vtanh.pop %v366
    %v388 = vrot.slane %v330, 7
    %v390 = vmul.f32 %v385, %v388
    %392 = vrot.lane.b32.xlu0 %v386, 68
    %v393 = vpop.permute.xlu0 %392
    %v395 = vmul.f32 %v385, %v393
    %397 = vrot.lane.b32.xlu0 %v395, 30
    %v398 = vpop.permute.xlu0 %397
    %v400 = vadd.f32 %v390, %v398
    %v401 = vtanh.pop %v400
    %403 = vrot.lane.b32.xlu0 %v401, 60
    %v404 = vpop.permute.xlu0 %403
    %v406 = vmul.f32 %v385, %v404
    %v408 = vrot.slane %v406, 4
    %409 = vrot.lane.b32.xlu0 %v408, 38
    %v410 = vpop.permute.xlu0 %409
    %v411 = vsel %vm62, %v410, 0
    %413 = vmatpush.msra.mxu0 0.0
    %414 = vmatpush.msra.mxu0 0.0
    %415 = vmatpush.msra.mxu0 0.0
    %416 = vmatpush.msra.mxu0 0.0
    %417 = vmatpush.msra.mxu0 0.0
    %418 = vmatpush.msra.mxu0 0.0
    %419 = vmatpush.msra.mxu0 0.0
    %420 = vmatpush.msra.mxu0 0.0
    %421 = vmatpush.msra.mxu0 0.0
    %422 = vmatpush.msra.mxu0 0.0
    %423 = vmatpush.msra.mxu0 0.0
    %424 = vmatpush.msra.mxu0 0.0
    %425 = vmatpush.msra.mxu0 %v68
    %426 = vmatpush.msra.mxu0 %v60
    %427 = vmatpush.msra.mxu0 %v59
    %428 = vmatpush.msra.mxu0 %v58
    %429 = vmatmul.f32.gmra.mxu0 %v411
    %v430 = vpop.f32.mrf.mxu0
    %v431 = vadd.f32 0.0, %v430
    %432 = vdwg.mxu0
    %v434 = vrot.slane %v431, 3
    %v436 = vadd.f32 %v57, %v434
    %v437 = vxor.u32 %v436, 2147483648
    %v438 = vmul.f32 %v437, 1.442695
    %v439 = vpow.pop %v438
    %v440 = vadd.f32 %v439, 1.0
    %v441 = vrcp.pop %v440
    %v442 = vmul.f32 %v440, %v441
    %v443 = vsub.f32 1.0, %v442
    %v444 = vmul.f32 %v441, %v443
    %v445 = vadd.f32 %v441, %v444
    %vm446 = vweird.f32 %v440
    %vm447 = vweird.f32 %v441
    %vm448 = vmor %vm446, %vm447
    %v449 = vsel %vm448, %v441, %v445
    %v450 = vand.u32 2147483647, %v440
    %vm451 = vcmp.eq.f32.partialorder %v450, 8.507059e+37
    %v452 = vand.u32 %v440, 2147483648
    %v453 = vor.u32 1.1754944e-38, %v452
    %v454 = vsel %vm451, %v453, %v449
    %v455 = vmul.f32 1.0, %v454
    %v456 = vtanh.pop %v436
    %v458 = vrot.slane %v400, 7
    %v460 = vmul.f32 %v455, %v458
    %462 = vrot.lane.b32.xlu0 %v456, 68
    %v463 = vpop.permute.xlu0 %462
    %v465 = vmul.f32 %v455, %v463
    %467 = vrot.lane.b32.xlu0 %v465, 30
    %v468 = vpop.permute.xlu0 %467
    %v470 = vadd.f32 %v460, %v468
    %v471 = vtanh.pop %v470
    %473 = vrot.lane.b32.xlu0 %v471, 60
    %v474 = vpop.permute.xlu0 %473
    %v476 = vmul.f32 %v455, %v474
    %v478 = vrot.slane %v476, 5
    %479 = vrot.lane.b32.xlu0 %v478, 38
    %v480 = vpop.permute.xlu0 %479
    %v481 = vsel %vm62, %v480, 0
    %483 = vmatpush.msra.mxu0 0.0
    %484 = vmatpush.msra.mxu0 0.0
    %485 = vmatpush.msra.mxu0 0.0
    %486 = vmatpush.msra.mxu0 0.0
    %487 = vmatpush.msra.mxu0 0.0
    %488 = vmatpush.msra.mxu0 0.0
    %489 = vmatpush.msra.mxu0 0.0
    %490 = vmatpush.msra.mxu0 0.0
    %491 = vmatpush.msra.mxu0 0.0
    %492 = vmatpush.msra.mxu0 0.0
    %493 = vmatpush.msra.mxu0 0.0
    %494 = vmatpush.msra.mxu0 0.0
    %495 = vmatpush.msra.mxu0 %v68
    %496 = vmatpush.msra.mxu0 %v60
    %497 = vmatpush.msra.mxu0 %v59
    %498 = vmatpush.msra.mxu0 %v58
    %499 = vmatmul.f32.gmra.mxu0 %v481
    %v500 = vpop.f32.mrf.mxu0
    %v501 = vadd.f32 0.0, %v500
    %502 = vdwg.mxu0
    %v504 = vrot.slane %v501, 2
    %v506 = vadd.f32 %v57, %v504
    %v507 = vxor.u32 %v506, 2147483648
    %v508 = vmul.f32 %v507, 1.442695
    %v509 = vpow.pop %v508
    %v510 = vadd.f32 %v509, 1.0
    %v511 = vrcp.pop %v510
    %v512 = vmul.f32 %v510, %v511
    %v513 = vsub.f32 1.0, %v512
    %v514 = vmul.f32 %v511, %v513
    %v515 = vadd.f32 %v511, %v514
    %vm516 = vweird.f32 %v510
    %vm517 = vweird.f32 %v511
    %vm518 = vmor %vm516, %vm517
    %v519 = vsel %vm518, %v511, %v515
    %v520 = vand.u32 2147483647, %v510
    %vm521 = vcmp.eq.f32.partialorder %v520, 8.507059e+37
    %v522 = vand.u32 %v510, 2147483648
    %v523 = vor.u32 1.1754944e-38, %v522
    %v524 = vsel %vm521, %v523, %v519
    %v525 = vmul.f32 1.0, %v524
    %v526 = vtanh.pop %v506
    %v528 = vrot.slane %v470, 7
    %v530 = vmul.f32 %v525, %v528
    %532 = vrot.lane.b32.xlu0 %v526, 68
    %v533 = vpop.permute.xlu0 %532
    %v535 = vmul.f32 %v525, %v533
    %537 = vrot.lane.b32.xlu0 %v535, 30
    %v538 = vpop.permute.xlu0 %537
    %v540 = vadd.f32 %v530, %v538
    %v541 = vtanh.pop %v540
    %543 = vrot.lane.b32.xlu0 %v541, 60
    %v544 = vpop.permute.xlu0 %543
    %v546 = vmul.f32 %v525, %v544
    %v548 = vrot.slane %v546, 6
    %549 = vrot.lane.b32.xlu0 %v548, 38
    %v550 = vpop.permute.xlu0 %549
    %v551 = vsel %vm62, %v550, 0
    %553 = vmatpush.msra.mxu0 0.0
    %554 = vmatpush.msra.mxu0 0.0
    %555 = vmatpush.msra.mxu0 0.0
    %556 = vmatpush.msra.mxu0 0.0
    %557 = vmatpush.msra.mxu0 0.0
    %558 = vmatpush.msra.mxu0 0.0
    %559 = vmatpush.msra.mxu0 0.0
    %560 = vmatpush.msra.mxu0 0.0
    %561 = vmatpush.msra.mxu0 0.0
    %562 = vmatpush.msra.mxu0 0.0
    %563 = vmatpush.msra.mxu0 0.0
    %564 = vmatpush.msra.mxu0 0.0
    %565 = vmatpush.msra.mxu0 %v68
    %566 = vmatpush.msra.mxu0 %v60
    %567 = vmatpush.msra.mxu0 %v59
    %568 = vmatpush.msra.mxu0 %v58
    %569 = vmatmul.f32.gmra.mxu0 %v551
    %v570 = vpop.f32.mrf.mxu0
    %v571 = vadd.f32 0.0, %v570
    %572 = vdwg.mxu0
    %v574 = vrot.slane %v571, 1
    %v576 = vadd.f32 %v57, %v574
    %v577 = vxor.u32 %v576, 2147483648
    %v578 = vmul.f32 %v577, 1.442695
    %v579 = vpow.pop %v578
    %v580 = vadd.f32 %v579, 1.0
    %v581 = vrcp.pop %v580
    %v582 = vmul.f32 %v580, %v581
    %v583 = vsub.f32 1.0, %v582
    %v584 = vmul.f32 %v581, %v583
    %v585 = vadd.f32 %v581, %v584
    %vm586 = vweird.f32 %v580
    %vm587 = vweird.f32 %v581
    %vm588 = vmor %vm586, %vm587
    %v589 = vsel %vm588, %v581, %v585
    %v590 = vand.u32 2147483647, %v580
    %vm591 = vcmp.eq.f32.partialorder %v590, 8.507059e+37
    %v592 = vand.u32 %v580, 2147483648
    %v593 = vor.u32 1.1754944e-38, %v592
    %v594 = vsel %vm591, %v593, %v589
    %v595 = vmul.f32 1.0, %v594
    %v596 = vtanh.pop %v576
    %v598 = vrot.slane %v540, 7
    %v600 = vmul.f32 %v595, %v598
    %602 = vrot.lane.b32.xlu0 %v596, 68
    %v603 = vpop.permute.xlu0 %602
    %v605 = vmul.f32 %v595, %v603
    %607 = vrot.lane.b32.xlu0 %v605, 30
    %v608 = vpop.permute.xlu0 %607
    %v610 = vadd.f32 %v600, %v608
    %v611 = vtanh.pop %v610
    %613 = vrot.lane.b32.xlu0 %v611, 60
    %v614 = vpop.permute.xlu0 %613
    %v616 = vmul.f32 %v595, %v614
    %v617 = vld [vmem:[%s4] sm:$0x1]
    %v619 = vperm.slane %v617, 0
    %620 = vrot.lane.b32.xlu0 %v619, 90
    %v621 = vpop.permute.xlu0 %620
    %v623 = vmul.f32 %v616, %v621
    %625 = vrot.lane.b32.xlu0 %v623, 38
    %v626 = vpop.permute.xlu0 %625
    %vm628 = vcmask 244743
    %v629 = vsel %vm628, %v626, 0.0
    %630 = vadd.xlane.f32.xlu0 %v629
    %v631 = vpop.xlane.xlu0 %630
    %v632 = vld [vmem:[#allocation2] sm:$0x1]
    %v634 = vperm.slane %v632, 0
    %v636 = vadd.f32 %v631, %v634
    %vm637 = vcmask 7175
    %638 = vst.msk [vmem:[#allocation6 - $0x7] sm:$0x80] %vm637, %v636
    // Predicated region
    $region30: #{tpu_custom_call.1} parent=1 // pred_check
      _
    $region31: #{tpu_custom_call.1} parent=1 // pred_check_branch
      %640 = sbr.rel (0) target = $region33
    $region32: #{tpu_custom_call.1} parent=1 // pred_region
      %642 = vsyncadd [#allocation5], 0
      %s644 = sshll.u32 [#allocation6], 4
      %s645 = int_to_ptr.vmem [resolvable:$true] %s644
      %s646 = sshll.u32 %s6, 4
      %s647 = int_to_ptr.hbm [resolvable:$true] %s646
      %649 = dma.vmem_to_hbm [thread:$0]  %s645, 16, %s647, [#allocation5]
    $region33: #{tpu_custom_call.1} parent=1 // pred_fallthru
      _
    // Predicated region
    $region34: #{tpu_custom_call.1} parent=1 // pred_check
      _
    $region35: #{tpu_custom_call.1} parent=1 // pred_check_branch
      %651 = sbr.rel (0) target = $region37
    $region36: #{tpu_custom_call.1} parent=1 // pred_region
      %653 = dma.done [#allocation5], 16
    $region37: #{tpu_custom_call.1} parent=1 // pred_fallthru
      _
    %654 = vsyncpa [#allocation4], 1
    %655 = vsyncpa [#allocation5], 1

</llo_original>
